<compile_context>
chip_gen: v7x
topology: tpu7x:2x2x1
jax: 0.10.0
libtpu: 0.0.40
codegen_flags: <defaults>
</compile_context>

<pallas_src>
import functools

import jax
import jax.numpy as jnp
from jax import lax
from jax.experimental import pallas as pl
from jax.experimental.pallas import tpu as pltpu


def _wavenet_kernel(x_ref, halo_ref, w0_ref, w1_ref, bd_ref, wrs_ref, brs_ref,
                    res_out_ref, skip_out_ref, *, d, cr, halo_len):
    # Blocks: x (1, Cr, Tt); halo (1, Cr, H) = tail H lanes of the PREVIOUS
    # time tile; w0/w1 (Cr, Cr); bd (Cr, 1); wrs (Cr+Cs, Cr); brs (Cr+Cs, 1).
    x = x_ref[0]          # (Cr, Tt)  current time tile
    halo = halo_ref[0]    # (Cr, H)   previous-tile tail (garbage when j == 0)
    tt = x.shape[1]
    H = halo_len

    # Halo contribution is only valid when this is NOT the first time tile;
    # for the first tile, positions t < d are causal left-padding (zeros).
    keep = (pl.program_id(1) != 0).astype(x.dtype)      # scalar 0/1
    shift_h = d % H
    head = halo if shift_h == 0 else pltpu.roll(halo, shift=shift_h, axis=1)
    head = head * keep                                  # (Cr, H); lanes [0,d) hold x[t-d]

    shift_c = d % tt
    cur_roll = x if shift_c == 0 else pltpu.roll(x, shift=shift_c, axis=1)

    lane_h = lax.broadcasted_iota(jnp.int32, head.shape, 1)
    if H == tt:
        xs = jnp.where(lane_h < d, head, cur_roll)                 # (Cr, Tt)
    else:
        xs_head = jnp.where(lane_h < d, head, cur_roll[:, :H])     # (Cr, H)
        xs = jnp.concatenate([xs_head, cur_roll[:, H:]], axis=1)   # (Cr, Tt)

    # Causal dilated conv (kernel_size=2): tap 0 applies to x[t-d], tap 1 to x[t].
    dil = (jnp.dot(w0_ref[...], xs, preferred_element_type=jnp.float32)
           + jnp.dot(w1_ref[...], x, preferred_element_type=jnp.float32)
           + bd_ref[...])                                           # (Cr, Tt) f32

    # Gated activation unit (VPU + EUP), full-lane vregs.
    gated = jnp.tanh(dil) * jax.nn.sigmoid(dil)

    # Fused residual + skip 1x1 convs: one matmul with M = Cr + Cs.
    rs = jnp.dot(wrs_ref[...], gated.astype(wrs_ref.dtype),
                 preferred_element_type=jnp.float32) + brs_ref[...]  # (Cr+Cs, Tt)

    res_out_ref[0] = (x + rs[:cr].astype(x.dtype)).astype(res_out_ref.dtype)
    skip_out_ref[0] = rs[cr:].astype(skip_out_ref.dtype)


def _choose_t_tile(T, d, B, t_tile=None, target=32768):
    """Pick a lane-dense T tile: multiple of 128 dividing T, >= d, <= target.

    Prefers a tile whose total grid size B * (T // tile) is even (v7x megacore
    balance). Falls back to a single full-T block when T is ragged or d > T.
    """
    if t_tile is not None:
        assert T % t_tile == 0, "t_tile must divide T"
        assert t_tile % 128 == 0 or t_tile == T, "t_tile must be a multiple of 128 (or == T)"
        assert t_tile == T or d <= t_tile, "halo reaches only one tile back: need d <= t_tile"
        return t_tile
    if T % 128 != 0:
        return T
    cands = [t for t in range(128, T + 1, 128) if T % t == 0 and t >= d]
    if not cands:
        return T
    under = [t for t in cands if t <= target]
    pool = under if under else [min(cands)]
    even = [t for t in pool if (B * (T // t)) % 2 == 0]
    return max(even) if even else max(pool)


def _choose_halo(Tt, d):
    """Smallest multiple of 128 that is >= d and divides Tt (else Tt)."""
    if d >= Tt:
        return Tt
    H = ((d + 127) // 128) * 128
    H = min(H, Tt)
    while Tt % H != 0:
        H += 128
        if H >= Tt:
            return Tt
    return H


def wavenet_layer_pallas(x_ncw, params, *, dilation: int, kernel_size: int = 2,
                         t_tile=None):
    """x_ncw: (B, Cr, T), PyTorch NCW layout. Returns (x + residual, skip) in NCW."""
    assert kernel_size == 2, "kernel matches the module default kernel_size=2"
    B, Cr, T = x_ncw.shape
    w_d, b_d = params["w_dilated"], params["b_dilated"]
    w_r, b_r = params["w_res"], params["b_res"]
    w_s, b_s = params["w_skip"], params["b_skip"]
    Cs = w_s.shape[0]
    d = dilation * (kernel_size - 1)

    Tt = _choose_t_tile(T, d, B, t_tile)
    nT = T // Tt
    H = _choose_halo(Tt, d)
    r = Tt // H  # halo blocks per time tile (static)

    # ---- one-time weight prep (wrapper side) ----
    w0 = w_d[:, :, 0]                                                 # (Cr, Cr) -> x[t-d]
    w1 = w_d[:, :, 1]                                                 # (Cr, Cr) -> x[t]
    bd = b_d.reshape(Cr, 1)
    wrs = jnp.concatenate([w_r[:, :, 0], w_s[:, :, 0]], axis=0)       # (Cr+Cs, Cr)
    brs = jnp.concatenate([b_r, b_s], axis=0).reshape(Cr + Cs, 1)

    # Explicit VMEM budget: double-buffered I/O + f32 intermediates + headroom,
    # capped at 48 MiB (leaves slack on v7x's 64 MiB physical VMEM per TC).
    itemsize = jnp.dtype(x_ncw.dtype).itemsize
    io_per_step = Tt * (2 * Cr + Cs) * itemsize + H * Cr * itemsize
    intermediates = Tt * (4 * Cr + Cs) * 4
    vmem_limit = int(min(max(3 * io_per_step + 2 * intermediates + (4 << 20),
                             16 << 20), 48 << 20))

    kernel = functools.partial(_wavenet_kernel, d=d, cr=Cr, halo_len=H)

    res_out, skip_out = pl.pallas_call(
        kernel,
        out_shape=(jax.ShapeDtypeStruct((B, Cr, T), x_ncw.dtype),
                   jax.ShapeDtypeStruct((B, Cs, T), x_ncw.dtype)),
        grid_spec=pltpu.PrefetchScalarGridSpec(
            num_scalar_prefetch=0,
            grid=(B, nT),
            in_specs=[
                # current T tile of x
                pl.BlockSpec((1, Cr, Tt), lambda b, j: (b, 0, j)),
                # small halo: tail H lanes of the PREVIOUS tile (clamped at 0;
                # the j == 0 case is zero-masked inside the kernel)
                pl.BlockSpec((1, Cr, H),
                             lambda b, j, r=r: (b, 0, jnp.maximum(j * r - 1, 0))),
                pl.BlockSpec((Cr, Cr), lambda b, j: (0, 0)),          # w0 (tap t-d)
                pl.BlockSpec((Cr, Cr), lambda b, j: (0, 0)),          # w1 (tap t)
                pl.BlockSpec((Cr, 1), lambda b, j: (0, 0)),           # dilated bias
                pl.BlockSpec((Cr + Cs, Cr), lambda b, j: (0, 0)),     # fused res+skip weight
                pl.BlockSpec((Cr + Cs, 1), lambda b, j: (0, 0)),      # fused res+skip bias
            ],
            out_specs=[
                pl.BlockSpec((1, Cr, Tt), lambda b, j: (b, 0, j)),
                pl.BlockSpec((1, Cs, Tt), lambda b, j: (b, 0, j)),
            ],
        ),
        compiler_params=pltpu.CompilerParams(
            dimension_semantics=("parallel", "parallel"),
            vmem_limit_bytes=vmem_limit),
    )(x_ncw, x_ncw, w0, w1, bd, wrs, brs)

    return res_out, skip_out


def wavenet_layer_ref(x_ncw, params, *, dilation: int, kernel_size: int = 2):
    """Pure-JAX reference mirroring the PyTorch module exactly (NCW layout)."""
    w_d, b_d = params["w_dilated"], params["b_dilated"]
    w_r, b_r = params["w_res"], params["b_res"]
    w_s, b_s = params["w_skip"], params["b_skip"]
    T = x_ncw.shape[2]
    pad = dilation * (kernel_size - 1)
    dil = lax.conv_general_dilated(
        x_ncw, w_d, window_strides=(1,), padding=[(pad, pad)],
        rhs_dilation=(dilation,), dimension_numbers=("NCH", "OIH", "NCH"))
    dil = dil[:, :, :T] + b_d[None, :, None]          # causal chop (out[..., :-pad])
    gated = jnp.tanh(dil) * jax.nn.sigmoid(dil)
    res = jnp.einsum("oi,bit->bot", w_r[:, :, 0], gated) + b_r[None, :, None]
    skip = jnp.einsum("oi,bit->bot", w_s[:, :, 0], gated) + b_s[None, :, None]
    return x_ncw + res, skip


def init_params(key, residual_channels: int, skip_channels: int,
                kernel_size: int = 2):
    ks = jax.random.split(key, 6)
    scale = 0.1
    return {
        "w_dilated": scale * jax.random.normal(
            ks[0], (residual_channels, residual_channels, kernel_size), jnp.float32),
        "b_dilated": scale * jax.random.normal(ks[1], (residual_channels,), jnp.float32),
        "w_res": scale * jax.random.normal(
            ks[2], (residual_channels, residual_channels, 1), jnp.float32),
        "b_res": scale * jax.random.normal(ks[3], (residual_channels,), jnp.float32),
        "w_skip": scale * jax.random.normal(
            ks[4], (skip_channels, residual_channels, 1), jnp.float32),
        "b_skip": scale * jax.random.normal(ks[5], (skip_channels,), jnp.float32),
    }


def _check(x, params, dilation, t_tile, tag):
    fn = jax.jit(functools.partial(wavenet_layer_pallas, dilation=dilation,
                                   kernel_size=2, t_tile=t_tile))
    res_out, skip_out = fn(x, params)
    jax.block_until_ready((res_out, skip_out))
    ref_res, ref_skip = wavenet_layer_ref(x, params, dilation=dilation, kernel_size=2)
    assert jnp.allclose(res_out, ref_res, atol=1e-4, rtol=1e-4), \
        (tag, float(jnp.max(jnp.abs(res_out - ref_res))))
    assert jnp.allclose(skip_out, ref_skip, atol=1e-4, rtol=1e-4), \
        (tag, float(jnp.max(jnp.abs(skip_out - ref_skip))))
    return res_out, skip_out


if __name__ == "__main__":
    # Small deterministic test. T is a multiple of 128 so the lane-dense path
    # is exercised; the explicit t_tile=128 run exercises the small-halo
    # cross-tile path, and dilation=128 exercises the d == t_tile edge case.
    B, Cr, Cs, T = 2, 8, 16, 512
    dilation = 4

    key = jax.random.PRNGKey(0)
    k_x, k_p = jax.random.split(key)
    x = jax.random.normal(k_x, (B, Cr, T), jnp.float32)     # PyTorch NCW input
    params = init_params(k_p, Cr, Cs, 2)

    res_out, skip_out = _check(x, params, dilation, None, "default-tile")   # single full-T tile
    _check(x, params, dilation, 128, "tiled-halo")                          # 4 tiles + 128-lane halo
    _check(x, params, 128, 128, "d-eq-tile")                                # d == Tt edge case

    assert res_out.shape == (B, Cr, T) and skip_out.shape == (B, Cs, T)
    print("KERNEL_OK")
</pallas_src>

<mosaic_0001>
module attributes {stable_mosaic.version = 11 : i64} {
  func.func @_wavenet_kernel(%arg0: i32, %arg1: i32, %arg2: memref<1x8x512xf32, #tpu.memory_space<vmem>>, %arg3: memref<1x8x128xf32, #tpu.memory_space<vmem>>, %arg4: memref<8x8xf32, #tpu.memory_space<vmem>>, %arg5: memref<8x8xf32, #tpu.memory_space<vmem>>, %arg6: memref<8x1xf32, #tpu.memory_space<vmem>>, %arg7: memref<24x8xf32, #tpu.memory_space<vmem>>, %arg8: memref<24x1xf32, #tpu.memory_space<vmem>>, %arg9: memref<1x8x512xf32, #tpu.memory_space<vmem>>, %arg10: memref<1x16x512xf32, #tpu.memory_space<vmem>>) attributes {dimension_semantics = [#tpu.dimension_semantics<parallel>, #tpu.dimension_semantics<parallel>], iteration_bounds = array<i64: 2, 1>, scalar_prefetch = 0 : i64, scratch_operands = 0 : i64, tpu.core_type = #tpu.core_type<tc>, window_params = [{transform_indices = @transform_0, window_bounds = array<i64: 1, 8, 512>}, {transform_indices = @transform_1, window_bounds = array<i64: 1, 8, 128>}, {pipeline_mode = #tpu.pipeline_mode<synchronous>, transform_indices = @transform_2, window_bounds = array<i64: 8, 8>}, {pipeline_mode = #tpu.pipeline_mode<synchronous>, transform_indices = @transform_3, window_bounds = array<i64: 8, 8>}, {pipeline_mode = #tpu.pipeline_mode<synchronous>, transform_indices = @transform_4, window_bounds = array<i64: 8, 1>}, {pipeline_mode = #tpu.pipeline_mode<synchronous>, transform_indices = @transform_5, window_bounds = array<i64: 24, 8>}, {pipeline_mode = #tpu.pipeline_mode<synchronous>, transform_indices = @transform_6, window_bounds = array<i64: 24, 1>}, {transform_indices = @transform_7, window_bounds = array<i64: 1, 8, 512>}, {transform_indices = @transform_8, window_bounds = array<i64: 1, 16, 512>}]} {
    %c0 = arith.constant 0 : index
    %c0_0 = arith.constant 0 : index
    %c0_1 = arith.constant 0 : index
    %0 = vector.load %arg2[%c0, %c0_0, %c0_1] : memref<1x8x512xf32, #tpu.memory_space<vmem>>, vector<1x8x512xf32>
    %1 = vector.shape_cast %0 : vector<1x8x512xf32> to vector<8x512xf32>
    %c0_2 = arith.constant 0 : index
    %c0_3 = arith.constant 0 : index
    %c0_4 = arith.constant 0 : index
    %2 = vector.load %arg3[%c0_2, %c0_3, %c0_4] : memref<1x8x128xf32, #tpu.memory_space<vmem>>, vector<1x8x128xf32>
    %3 = vector.shape_cast %2 : vector<1x8x128xf32> to vector<8x128xf32>
    %c0_i32 = arith.constant 0 : i32
    %4 = arith.cmpi ne, %arg1, %c0_i32 : i32
    %5 = arith.extui %4 : i1 to i32
    %6 = arith.sitofp %5 : i32 to f32
    %c4_i32 = arith.constant 4 : i32
    %7 = tpu.dynamic_rotate %3 by %c4_i32 dim 1 : vector<8x128xf32>, i32 -> vector<8x128xf32>
    %8 = vector.broadcast %6 : f32 to vector<8x128xf32>
    %9 = arith.mulf %7, %8 : vector<8x128xf32>
    %c4_i32_5 = arith.constant 4 : i32
    %10 = tpu.dynamic_rotate %1 by %c4_i32_5 dim 1 : vector<8x512xf32>, i32 -> vector<8x512xf32>
    %11 = tpu.iota {dimensions = array<i32: 1>} : vector<8x128xi32>
    %c4_i32_6 = arith.constant 4 : i32
    %12 = vector.broadcast %c4_i32_6 : i32 to vector<8x128xi32>
    %13 = arith.cmpi slt, %11, %12 : vector<8x128xi32>
    %14 = vector.extract_strided_slice %10 {offsets = [0, 0], sizes = [8, 128], strides = [1, 1]} : vector<8x512xf32> to vector<8x128xf32>
    %15 = arith.select %13, %9, %14 : vector<8x128xi1>, vector<8x128xf32>
    %16 = vector.extract_strided_slice %10 {offsets = [0, 128], sizes = [8, 384], strides = [1, 1]} : vector<8x512xf32> to vector<8x384xf32>
    %17 = tpu.concatenate %15, %16 in 1 : vector<8x128xf32>, vector<8x384xf32> -> vector<8x512xf32>
    %c0_7 = arith.constant 0 : index
    %c0_8 = arith.constant 0 : index
    %18 = vector.load %arg4[%c0_7, %c0_8] : memref<8x8xf32, #tpu.memory_space<vmem>>, vector<8x8xf32>
    %cst = arith.constant dense<0.000000e+00> : vector<8x512xf32>
    %19 = tpu.matmul %18, %17, %cst {dimension_numbers = #tpu.dot_dimension_numbers<[1], [0], [0], [1], [0, 0, 1, 1], [], []>} : vector<8x8xf32>, vector<8x512xf32>, vector<8x512xf32> -> vector<8x512xf32>
    %c0_9 = arith.constant 0 : index
    %c0_10 = arith.constant 0 : index
    %20 = vector.load %arg5[%c0_9, %c0_10] : memref<8x8xf32, #tpu.memory_space<vmem>>, vector<8x8xf32>
    %cst_11 = arith.constant dense<0.000000e+00> : vector<8x512xf32>
    %21 = tpu.matmul %20, %1, %cst_11 {dimension_numbers = #tpu.dot_dimension_numbers<[1], [0], [0], [1], [0, 0, 1, 1], [], []>} : vector<8x8xf32>, vector<8x512xf32>, vector<8x512xf32> -> vector<8x512xf32>
    %22 = arith.addf %19, %21 : vector<8x512xf32>
    %c0_12 = arith.constant 0 : index
    %c0_13 = arith.constant 0 : index
    %23 = vector.load %arg6[%c0_12, %c0_13] : memref<8x1xf32, #tpu.memory_space<vmem>>, vector<8x1xf32>
    %24 = vector.broadcast %23 : vector<8x1xf32> to vector<8x512xf32>
    %25 = arith.addf %22, %24 : vector<8x512xf32>
    %26 = math.tanh %25 : vector<8x512xf32>
    %27 = arith.negf %25 : vector<8x512xf32>
    %28 = math.exp %27 : vector<8x512xf32>
    %cst_14 = arith.constant 1.000000e+00 : f32
    %29 = vector.broadcast %cst_14 : f32 to vector<8x512xf32>
    %30 = arith.addf %29, %28 : vector<8x512xf32>
    %31 = arith.divf %29, %30 : vector<8x512xf32>
    %32 = arith.mulf %26, %31 : vector<8x512xf32>
    %c0_15 = arith.constant 0 : index
    %c0_16 = arith.constant 0 : index
    %33 = vector.load %arg7[%c0_15, %c0_16] : memref<24x8xf32, #tpu.memory_space<vmem>>, vector<24x8xf32>
    %cst_17 = arith.constant dense<0.000000e+00> : vector<24x512xf32>
    %34 = tpu.matmul %33, %32, %cst_17 {dimension_numbers = #tpu.dot_dimension_numbers<[1], [0], [0], [1], [0, 0, 1, 1], [], []>} : vector<24x8xf32>, vector<8x512xf32>, vector<24x512xf32> -> vector<24x512xf32>
    %c0_18 = arith.constant 0 : index
    %c0_19 = arith.constant 0 : index
    %35 = vector.load %arg8[%c0_18, %c0_19] : memref<24x1xf32, #tpu.memory_space<vmem>>, vector<24x1xf32>
    %36 = vector.broadcast %35 : vector<24x1xf32> to vector<24x512xf32>
    %37 = arith.addf %34, %36 : vector<24x512xf32>
    %38 = vector.extract_strided_slice %37 {offsets = [0, 0], sizes = [8, 512], strides = [1, 1]} : vector<24x512xf32> to vector<8x512xf32>
    %39 = arith.addf %1, %38 : vector<8x512xf32>
    %c0_20 = arith.constant 0 : index
    %c0_21 = arith.constant 0 : index
    %c0_22 = arith.constant 0 : index
    %40 = vector.load %arg9[%c0_20, %c0_21, %c0_22] : memref<1x8x512xf32, #tpu.memory_space<vmem>>, vector<1x8x512xf32>
    %41 = vector.shape_cast %40 : vector<1x8x512xf32> to vector<8x512xf32>
    %42 = vector.shape_cast %39 : vector<8x512xf32> to vector<1x8x512xf32>
    tpu.vector_store %arg9[%c0_20, %c0_21, %c0_22], %42 {strides = array<i32>} : memref<1x8x512xf32, #tpu.memory_space<vmem>>, vector<1x8x512xf32>,
    %43 = vector.extract_strided_slice %37 {offsets = [8, 0], sizes = [16, 512], strides = [1, 1]} : vector<24x512xf32> to vector<16x512xf32>
    %c0_23 = arith.constant 0 : index
    %c0_24 = arith.constant 0 : index
    %c0_25 = arith.constant 0 : index
    %44 = vector.load %arg10[%c0_23, %c0_24, %c0_25] : memref<1x16x512xf32, #tpu.memory_space<vmem>>, vector<1x16x512xf32>
    %45 = vector.shape_cast %44 : vector<1x16x512xf32> to vector<16x512xf32>
    %46 = vector.shape_cast %43 : vector<16x512xf32> to vector<1x16x512xf32>
    tpu.vector_store %arg10[%c0_23, %c0_24, %c0_25], %46 {strides = array<i32>} : memref<1x16x512xf32, #tpu.memory_space<vmem>>, vector<1x16x512xf32>,
    return
  }
  func.func @transform_0(%arg0: i32, %arg1: i32) -> (i32, i32, i32) {
    %c0_i32 = arith.constant 0 : i32
    %c0_i32_0 = arith.constant 0 : i32
    return %arg0, %c0_i32, %arg1 : i32, i32, i32
  }
  func.func @transform_1(%arg0: i32, %arg1: i32) -> (i32, i32, i32) {
    %c4_i32 = arith.constant 4 : i32
    %0 = arith.muli %arg1, %c4_i32 : i32
    %c1_i32 = arith.constant 1 : i32
    %1 = arith.subi %0, %c1_i32 : i32
    %c0_i32 = arith.constant 0 : i32
    %2 = arith.maxsi %1, %c0_i32 : i32
    %c0_i32_0 = arith.constant 0 : i32
    %c0_i32_1 = arith.constant 0 : i32
    return %arg0, %c0_i32_0, %2 : i32, i32, i32
  }
  func.func @transform_2(%arg0: i32, %arg1: i32) -> (i32, i32) {
    %c0_i32 = arith.constant 0 : i32
    %c0_i32_0 = arith.constant 0 : i32
    %c0_i32_1 = arith.constant 0 : i32
    return %c0_i32, %c0_i32_0 : i32, i32
  }
  func.func @transform_3(%arg0: i32, %arg1: i32) -> (i32, i32) {
    %c0_i32 = arith.constant 0 : i32
    %c0_i32_0 = arith.constant 0 : i32
    %c0_i32_1 = arith.constant 0 : i32
    return %c0_i32, %c0_i32_0 : i32, i32
  }
  func.func @transform_4(%arg0: i32, %arg1: i32) -> (i32, i32) {
    %c0_i32 = arith.constant 0 : i32
    %c0_i32_0 = arith.constant 0 : i32
    %c0_i32_1 = arith.constant 0 : i32
    return %c0_i32, %c0_i32_0 : i32, i32
  }
  func.func @transform_5(%arg0: i32, %arg1: i32) -> (i32, i32) {
    %c0_i32 = arith.constant 0 : i32
    %c0_i32_0 = arith.constant 0 : i32
    %c0_i32_1 = arith.constant 0 : i32
    return %c0_i32, %c0_i32_0 : i32, i32
  }
  func.func @transform_6(%arg0: i32, %arg1: i32) -> (i32, i32) {
    %c0_i32 = arith.constant 0 : i32
    %c0_i32_0 = arith.constant 0 : i32
    %c0_i32_1 = arith.constant 0 : i32
    return %c0_i32, %c0_i32_0 : i32, i32
  }
  func.func @transform_7(%arg0: i32, %arg1: i32) -> (i32, i32, i32) {
    %c0_i32 = arith.constant 0 : i32
    %c0_i32_0 = arith.constant 0 : i32
    return %arg0, %c0_i32, %arg1 : i32, i32, i32
  }
  func.func @transform_8(%arg0: i32, %arg1: i32) -> (i32, i32, i32) {
    %c0_i32 = arith.constant 0 : i32
    %c0_i32_0 = arith.constant 0 : i32
    return %arg0, %c0_i32, %arg1 : i32, i32, i32
  }
}

</mosaic_0001>

<llo_original>
// kernel: wavenet_layer_pallas.1
$region0: #{wavenet_layer_pallas.1}
  #allocation0 [shape = 'u32[]', space=smem, size = 0x4, offset = 0x4, fixed_abs, tag = 'smem constant byte address 0x4 - core index']
  #allocation1 [shape = 'u32[144,128]{1,0:T(1,128)}', space=vmem, size = 0x12000, scoped, tag = 'internal scratch']
  %s0 = inlined_call_operand.vmem [shape: f32[2,8,512], index: 0, kind: input, shape index: {}, may-alias: {0,1}]
  %s1 = inlined_call_operand.vmem [shape: f32[2,8,512], index: 1, kind: input, shape index: {}, may-alias: {0,1}]
  %s2 = inlined_call_operand.vmem [shape: f32[8,8], index: 2, kind: input, shape index: {}]
  %s3 = inlined_call_operand.vmem [shape: f32[8,8], index: 3, kind: input, shape index: {}]
  %s4 = inlined_call_operand.vmem [shape: f32[8,1], index: 4, kind: input, shape index: {}]
  %s5 = inlined_call_operand.vmem [shape: f32[24,8], index: 5, kind: input, shape index: {}]
  %s6 = inlined_call_operand.vmem [shape: f32[24,1], index: 6, kind: input, shape index: {}]
  %s7 = inlined_call_operand.hbm [shape: f32[2,8,512], index: 7, kind: output, shape index: {0}]
  %s8 = inlined_call_operand.hbm [shape: f32[2,16,512], index: 8, kind: output, shape index: {1}]
  %9 = xla_tuple %s7, %s8
  %s10 = sld [smem:[#allocation0]]
  $region69: #{wavenet_layer_pallas.1} parent=0
    _
  %s12 = ssub.s32 1, %s10
  %s13 = scalar_select 0, %s12, %s10
  $region1: #{wavenet_layer_pallas.1} parent=0
    #allocation2 [shape = 'u8[32768]{0}', space=vmem, size = 0x8000, scoped, tag = 'output window, operand 0']
    #allocation3 [shape = 's32[2]{0}', space=sflag, size = 0x8, scoped, tag = 'scoped memory for wavenet_layer_pallas.1']
    #allocation4 [shape = 'u8[65536]{0}', space=vmem, size = 0x10000, scoped, tag = 'output window, operand 1']
    #allocation5 [shape = 's32[2]{0}', space=sflag, size = 0x8, scoped, tag = 'scoped memory for wavenet_layer_pallas.1']
    %14 = vsyncpa [#allocation3], 0
    %s15 = scalar_lea.sflag [#allocation3], 1
    %16 = vsyncpa %s15, 0
    %17 = vsyncpa [#allocation5], 0
    %s18 = scalar_lea.sflag [#allocation5], 1
    %19 = vsyncpa %s18, 0
    loop: start=0, step=1, limit=4
    $region2: #{wavenet_layer_pallas.1} parent=1 // loop_pre_header
      _
    $region3: #{wavenet_layer_pallas.1} parent=1 // loop_header
      %s21 = sphi 0, %s25
      %p22 = scmp.ge.s32.totalorder %s21, 4
      %s28 = sphi 0, %s40
      %s29 = sphi 0, %s36
      %s30 = sphi 0, %s28
      %s31 = sphi 0, %s29
      %s32 = sphi 0, %s30
      %s33 = sphi 0, %s31
      %s45 = sphi 0, %s47
      %s48 = sphi 0, %s45
      %s49 = sphi 0, %s48
      %s65 = sphi 0, %s49
      %s81 = sphi 0, %s83
      %s84 = sphi 0, %s81
      %s85 = sphi 0, %s84
      %s101 = sphi 0, %s85
      %s105 = sphi 0, %s105
      %s107 = sphi 0, %s105
      %s108 = sphi 0, %s107
      %s122 = sphi 0, %s108
      %s126 = sphi 0, %s126
      %s128 = sphi 0, %s126
      %s129 = sphi 0, %s128
      %s143 = sphi 0, %s129
      %s147 = sphi 0, %s147
      %s149 = sphi 0, %s147
      %s150 = sphi 0, %s149
      %s164 = sphi 0, %s150
      %s168 = sphi 0, %s168
      %s170 = sphi 0, %s168
      %s171 = sphi 0, %s170
      %s185 = sphi 0, %s171
      %s189 = sphi 0, %s189
      %s191 = sphi 0, %s189
      %s192 = sphi 0, %s191
      %s206 = sphi 0, %s192
      %s214 = sphi 0, %s216
      %s217 = sphi 0, %s214
      %s218 = sphi 0, %s217
      %s234 = sphi 0, %s218
      %s242 = sphi 0, %s244
      %s245 = sphi 0, %s242
      %s246 = sphi 0, %s245
      %s262 = sphi 0, %s246
    $region4: #{wavenet_layer_pallas.1} parent=1 // loop_header_branch
      %24 = sbr.rel (%p22) target = $region8
    $region5: #{wavenet_layer_pallas.1} parent=1 // loop_body
      %s26 = ssub.s32 %s21, 1
      %s27 = ssub.s32 %s21, 2
      %s34 = sadd.s32 1, %s29
      %p35 = scmp.ge.s32.totalorder %s34, 1
      %s36 = scalar_select %p35, 0, %s34
      %s37 = sadd.s32 1, %s28
      %s38 = scalar_select %p35, %s37, %s28
      %p39 = scmp.ge.s32.totalorder %s38, 2
      %s40 = scalar_select %p39, 0, %s38
      %s41 = ssub.s32 %s28, %s40
      %s42 = ssub.s32 %s29, %s36
      %s43 = sor.u32 %s41, %s42
      %p44 = scmp.eq.s32.totalorder %s43, 0
      %s46 = sadd.s32 %s45, 1
      %s47 = scalar_select %p44, %s45, %s46
      %p50 = pneg %p44
      %p51 = scmp.eq.s32.totalorder %s21, 1
      %p52 = por %p50, %p51
      %p53 = scmp.ne.s32.totalorder %s45, %s48
      %p54 = scmp.eq.s32.totalorder %s21, 0
      %p55 = por %p53, %p54
      %p56 = scmp.ne.s32.totalorder %s45, %s48
      %p57 = scmp.eq.s32.totalorder %s26, 1
      %p58 = por %p56, %p57
      %p59 = scmp.ne.s32.totalorder %s48, %s49
      %p60 = scmp.eq.s32.totalorder %s26, 0
      %p61 = por %p59, %p60
      %p62 = scmp.ne.s32.totalorder %s48, %s49
      %p63 = scmp.eq.s32.totalorder %s27, 1
      %p64 = por %p62, %p63
      %p66 = scmp.ne.s32.totalorder %s49, %s65
      %p67 = scmp.eq.s32.totalorder %s27, 0
      %p68 = por %p66, %p67
      %s69 = smul.u32 %s29, 4
      %s70 = ssub.s32 %s69, 1
      %p71 = scmp.gt.s32.totalorder %s70, 0
      %s72 = scalar_select %p71, %s70, 0
      %s73 = smul.u32 %s36, 4
      %s74 = ssub.s32 %s73, 1
      %p75 = scmp.gt.s32.totalorder %s74, 0
      %s76 = scalar_select %p75, %s74, 0
      %s77 = ssub.s32 %s28, %s40
      %s78 = ssub.s32 %s72, %s76
      %s79 = sor.u32 %s77, %s78
      %p80 = scmp.eq.s32.totalorder %s79, 0
      %s82 = sadd.s32 %s81, 1
      %s83 = scalar_select %p80, %s81, %s82
      %p86 = pneg %p80
      %p87 = scmp.eq.s32.totalorder %s21, 1
      %p88 = por %p86, %p87
      %p89 = scmp.ne.s32.totalorder %s81, %s84
      %p90 = scmp.eq.s32.totalorder %s21, 0
      %p91 = por %p89, %p90
      %p92 = scmp.ne.s32.totalorder %s81, %s84
      %p93 = scmp.eq.s32.totalorder %s26, 1
      %p94 = por %p92, %p93
      %p95 = scmp.ne.s32.totalorder %s84, %s85
      %p96 = scmp.eq.s32.totalorder %s26, 0
      %p97 = por %p95, %p96
      %p98 = scmp.ne.s32.totalorder %s84, %s85
      %p99 = scmp.eq.s32.totalorder %s27, 1
      %p100 = por %p98, %p99
      %p102 = scmp.ne.s32.totalorder %s85, %s101
      %p103 = scmp.eq.s32.totalorder %s27, 0
      %p104 = por %p102, %p103
      %s106 = sadd.s32 %s105, 1
      %p109 = scmp.eq.s32.totalorder %s21, 1
      %p110 = scmp.ne.s32.totalorder %s105, %s107
      %p111 = scmp.eq.s32.totalorder %s21, 0
      %p112 = por %p110, %p111
      %p113 = scmp.ne.s32.totalorder %s105, %s107
      %p114 = scmp.eq.s32.totalorder %s26, 1
      %p115 = por %p113, %p114
      %p116 = scmp.ne.s32.totalorder %s107, %s108
      %p117 = scmp.eq.s32.totalorder %s26, 0
      %p118 = por %p116, %p117
      %p119 = scmp.ne.s32.totalorder %s107, %s108
      %p120 = scmp.eq.s32.totalorder %s27, 1
      %p121 = por %p119, %p120
      %p123 = scmp.ne.s32.totalorder %s108, %s122
      %p124 = scmp.eq.s32.totalorder %s27, 0
      %p125 = por %p123, %p124
      %s127 = sadd.s32 %s126, 1
      %p130 = scmp.eq.s32.totalorder %s21, 1
      %p131 = scmp.ne.s32.totalorder %s126, %s128
      %p132 = scmp.eq.s32.totalorder %s21, 0
      %p133 = por %p131, %p132
      %p134 = scmp.ne.s32.totalorder %s126, %s128
      %p135 = scmp.eq.s32.totalorder %s26, 1
      %p136 = por %p134, %p135
      %p137 = scmp.ne.s32.totalorder %s128, %s129
      %p138 = scmp.eq.s32.totalorder %s26, 0
      %p139 = por %p137, %p138
      %p140 = scmp.ne.s32.totalorder %s128, %s129
      %p141 = scmp.eq.s32.totalorder %s27, 1
      %p142 = por %p140, %p141
      %p144 = scmp.ne.s32.totalorder %s129, %s143
      %p145 = scmp.eq.s32.totalorder %s27, 0
      %p146 = por %p144, %p145
      %s148 = sadd.s32 %s147, 1
      %p151 = scmp.eq.s32.totalorder %s21, 1
      %p152 = scmp.ne.s32.totalorder %s147, %s149
      %p153 = scmp.eq.s32.totalorder %s21, 0
      %p154 = por %p152, %p153
      %p155 = scmp.ne.s32.totalorder %s147, %s149
      %p156 = scmp.eq.s32.totalorder %s26, 1
      %p157 = por %p155, %p156
      %p158 = scmp.ne.s32.totalorder %s149, %s150
      %p159 = scmp.eq.s32.totalorder %s26, 0
      %p160 = por %p158, %p159
      %p161 = scmp.ne.s32.totalorder %s149, %s150
      %p162 = scmp.eq.s32.totalorder %s27, 1
      %p163 = por %p161, %p162
      %p165 = scmp.ne.s32.totalorder %s150, %s164
      %p166 = scmp.eq.s32.totalorder %s27, 0
      %p167 = por %p165, %p166
      %s169 = sadd.s32 %s168, 1
      %p172 = scmp.eq.s32.totalorder %s21, 1
      %p173 = scmp.ne.s32.totalorder %s168, %s170
      %p174 = scmp.eq.s32.totalorder %s21, 0
      %p175 = por %p173, %p174
      %p176 = scmp.ne.s32.totalorder %s168, %s170
      %p177 = scmp.eq.s32.totalorder %s26, 1
      %p178 = por %p176, %p177
      %p179 = scmp.ne.s32.totalorder %s170, %s171
      %p180 = scmp.eq.s32.totalorder %s26, 0
      %p181 = por %p179, %p180
      %p182 = scmp.ne.s32.totalorder %s170, %s171
      %p183 = scmp.eq.s32.totalorder %s27, 1
      %p184 = por %p182, %p183
      %p186 = scmp.ne.s32.totalorder %s171, %s185
      %p187 = scmp.eq.s32.totalorder %s27, 0
      %p188 = por %p186, %p187
      %s190 = sadd.s32 %s189, 1
      %p193 = scmp.eq.s32.totalorder %s21, 1
      %p194 = scmp.ne.s32.totalorder %s189, %s191
      %p195 = scmp.eq.s32.totalorder %s21, 0
      %p196 = por %p194, %p195
      %p197 = scmp.ne.s32.totalorder %s189, %s191
      %p198 = scmp.eq.s32.totalorder %s26, 1
      %p199 = por %p197, %p198
      %p200 = scmp.ne.s32.totalorder %s191, %s192
      %p201 = scmp.eq.s32.totalorder %s26, 0
      %p202 = por %p200, %p201
      %p203 = scmp.ne.s32.totalorder %s191, %s192
      %p204 = scmp.eq.s32.totalorder %s27, 1
      %p205 = por %p203, %p204
      %p207 = scmp.ne.s32.totalorder %s192, %s206
      %p208 = scmp.eq.s32.totalorder %s27, 0
      %p209 = por %p207, %p208
      %s210 = ssub.s32 %s28, %s40
      %s211 = ssub.s32 %s29, %s36
      %s212 = sor.u32 %s210, %s211
      %p213 = scmp.eq.s32.totalorder %s212, 0
      %s215 = sadd.s32 %s214, 1
      %s216 = scalar_select %p213, %s214, %s215
      %p219 = pneg %p213
      %p220 = scmp.eq.s32.totalorder %s21, 1
      %p221 = por %p219, %p220
      %p222 = scmp.ne.s32.totalorder %s214, %s217
      %p223 = scmp.eq.s32.totalorder %s21, 0
      %p224 = por %p222, %p223
      %p225 = scmp.ne.s32.totalorder %s214, %s217
      %p226 = scmp.eq.s32.totalorder %s26, 1
      %p227 = por %p225, %p226
      %p228 = scmp.ne.s32.totalorder %s217, %s218
      %p229 = scmp.eq.s32.totalorder %s26, 0
      %p230 = por %p228, %p229
      %p231 = scmp.ne.s32.totalorder %s217, %s218
      %p232 = scmp.eq.s32.totalorder %s27, 1
      %p233 = por %p231, %p232
      %p235 = scmp.ne.s32.totalorder %s218, %s234
      %p236 = scmp.eq.s32.totalorder %s27, 0
      %p237 = por %p235, %p236
      %s238 = ssub.s32 %s28, %s40
      %s239 = ssub.s32 %s29, %s36
      %s240 = sor.u32 %s238, %s239
      %p241 = scmp.eq.s32.totalorder %s240, 0
      %s243 = sadd.s32 %s242, 1
      %s244 = scalar_select %p241, %s242, %s243
      %p247 = pneg %p241
      %p248 = scmp.eq.s32.totalorder %s21, 1
      %p249 = por %p247, %p248
      %p250 = scmp.ne.s32.totalorder %s242, %s245
      %p251 = scmp.eq.s32.totalorder %s21, 0
      %p252 = por %p250, %p251
      %p253 = scmp.ne.s32.totalorder %s242, %s245
      %p254 = scmp.eq.s32.totalorder %s26, 1
      %p255 = por %p253, %p254
      %p256 = scmp.ne.s32.totalorder %s245, %s246
      %p257 = scmp.eq.s32.totalorder %s26, 0
      %p258 = por %p256, %p257
      %p259 = scmp.ne.s32.totalorder %s245, %s246
      %p260 = scmp.eq.s32.totalorder %s27, 1
      %p261 = por %p259, %p260
      %p263 = scmp.ne.s32.totalorder %s246, %s262
      %p264 = scmp.eq.s32.totalorder %s27, 0
      %p265 = por %p263, %p264
      %p266 = scmp.le.s32.totalorder 1, %s21
      %p267 = scmp.lt.s32.totalorder %s21, 3
      %p268 = pnand %p266, %p267
      %p269 = pneg %p268
      // Predicated region
      $region9: #{wavenet_layer_pallas.1} parent=5 // pred_check
        _
      $region10: #{wavenet_layer_pallas.1} parent=5 // pred_check_branch
        %271 = sbr.rel (%p268) target = $region12
      $region11: #{wavenet_layer_pallas.1} parent=5 // pred_region
        %s272 = ssub.s32 %s21, 1
        // Predicated region
        $region13: #{wavenet_layer_pallas.1} parent=11 // pred_check
          %p273 = pneg %p118
        $region14: #{wavenet_layer_pallas.1} parent=11 // pred_check_branch
          %275 = sbr.rel (%p273) target = $region16
        $region15: #{wavenet_layer_pallas.1} parent=11 // pred_region
          _
        $region16: #{wavenet_layer_pallas.1} parent=11 // pred_fallthru
          _
        // Predicated region
        $region17: #{wavenet_layer_pallas.1} parent=11 // pred_check
          %p276 = pneg %p139
        $region18: #{wavenet_layer_pallas.1} parent=11 // pred_check_branch
          %278 = sbr.rel (%p276) target = $region20
        $region19: #{wavenet_layer_pallas.1} parent=11 // pred_region
          _
        $region20: #{wavenet_layer_pallas.1} parent=11 // pred_fallthru
          _
        // Predicated region
        $region21: #{wavenet_layer_pallas.1} parent=11 // pred_check
          %p279 = pneg %p160
        $region22: #{wavenet_layer_pallas.1} parent=11 // pred_check_branch
          %281 = sbr.rel (%p279) target = $region24
        $region23: #{wavenet_layer_pallas.1} parent=11 // pred_region
          _
        $region24: #{wavenet_layer_pallas.1} parent=11 // pred_fallthru
          _
        // Predicated region
        $region25: #{wavenet_layer_pallas.1} parent=11 // pred_check
          %p282 = pneg %p181
        $region26: #{wavenet_layer_pallas.1} parent=11 // pred_check_branch
          %284 = sbr.rel (%p282) target = $region28
        $region27: #{wavenet_layer_pallas.1} parent=11 // pred_region
          _
        $region28: #{wavenet_layer_pallas.1} parent=11 // pred_fallthru
          _
        // Predicated region
        $region29: #{wavenet_layer_pallas.1} parent=11 // pred_check
          %p285 = pneg %p202
        $region30: #{wavenet_layer_pallas.1} parent=11 // pred_check_branch
          %287 = sbr.rel (%p285) target = $region32
        $region31: #{wavenet_layer_pallas.1} parent=11 // pred_region
          _
        $region32: #{wavenet_layer_pallas.1} parent=11 // pred_fallthru
          _
      $region12: #{wavenet_layer_pallas.1} parent=5 // pred_fallthru
        _
      %p288 = scmp.lt.s32.totalorder %s21, 2
      // Predicated region
      $region33: #{wavenet_layer_pallas.1} parent=5 // pred_check
        %p289 = pneg %p288
      $region34: #{wavenet_layer_pallas.1} parent=5 // pred_check_branch
        %291 = sbr.rel (%p289) target = $region36
      $region35: #{wavenet_layer_pallas.1} parent=5 // pred_region
        // Predicated region
        $region37: #{wavenet_layer_pallas.1} parent=35 // pred_check
          %p292 = pneg %p55
        $region38: #{wavenet_layer_pallas.1} parent=35 // pred_check_branch
          %294 = sbr.rel (%p292) target = $region40
        $region39: #{wavenet_layer_pallas.1} parent=35 // pred_region
          %s295 = smul.u32 4, %s29
          %p296 = scmp.lt.s32.totalorder %s28, 1
          %s297 = scalar_select %p296, %s28, 1
          %p298 = scmp.lt.s32.totalorder %s295, 3
          %s299 = scalar_select %p298, %s295, 3
          %s300 = smul.addr %s297, 4
          %s301 = sadd.s32 %s299, %s300
          %s302 = smul.addr %s301, 8
          %s303 = scalar_lea.vmem %s0, %s302
          %s304 = smul.u32 4, %s29
        $region40: #{wavenet_layer_pallas.1} parent=35 // pred_fallthru
          _
        // Predicated region
        $region41: #{wavenet_layer_pallas.1} parent=35 // pred_check
          %p305 = pneg %p91
        $region42: #{wavenet_layer_pallas.1} parent=35 // pred_check_branch
          %307 = sbr.rel (%p305) target = $region44
        $region43: #{wavenet_layer_pallas.1} parent=35 // pred_region
          %s308 = smul.u32 %s29, 4
          %s309 = ssub.s32 %s308, 1
          %p310 = scmp.gt.s32.totalorder %s309, 0
          %s311 = scalar_select %p310, %s309, 0
          %p312 = scmp.lt.s32.totalorder %s28, 1
          %s313 = scalar_select %p312, %s28, 1
          %p314 = scmp.lt.s32.totalorder %s311, 3
          %s315 = scalar_select %p314, %s311, 3
          %s316 = smul.addr %s313, 4
          %s317 = sadd.s32 %s315, %s316
          %s318 = smul.addr %s317, 8
          %s319 = scalar_lea.vmem %s1, %s318
          %s320 = smul.u32 %s29, 4
          %s321 = ssub.s32 %s320, 1
          %p322 = scmp.gt.s32.totalorder %s321, 0
          %s323 = scalar_select %p322, %s321, 0
        $region44: #{wavenet_layer_pallas.1} parent=35 // pred_fallthru
          _
      $region36: #{wavenet_layer_pallas.1} parent=5 // pred_fallthru
        _
      %p324 = scmp.le.s32.totalorder 1, %s21
      %p325 = scmp.lt.s32.totalorder %s21, 3
      %p326 = pnand %p324, %p325
      %p327 = pneg %p326
      // Predicated region
      $region45: #{wavenet_layer_pallas.1} parent=5 // pred_check
        _
      $region46: #{wavenet_layer_pallas.1} parent=5 // pred_check_branch
        %329 = sbr.rel (%p326) target = $region48
      $region47: #{wavenet_layer_pallas.1} parent=5 // pred_region
        %s330 = ssub.s32 %s21, 1
        %s331 = smul.u32 4, %s31
        %p332 = scmp.lt.s32.totalorder %s30, 1
        %s333 = scalar_select %p332, %s30, 1
        %p334 = scmp.lt.s32.totalorder %s331, 3
        %s335 = scalar_select %p334, %s331, 3
        %s336 = smul.addr %s333, 4
        %s337 = sadd.s32 %s335, %s336
        %s338 = smul.addr %s337, 8
        %s339 = scalar_lea.vmem %s0, %s338
        %p340 = pneg %p61
        %p341 = pneg %p58
        %s342 = smul.u32 %s31, 4
        %s343 = ssub.s32 %s342, 1
        %p344 = scmp.gt.s32.totalorder %s343, 0
        %s345 = scalar_select %p344, %s343, 0
        %p346 = scmp.lt.s32.totalorder %s30, 1
        %s347 = scalar_select %p346, %s30, 1
        %p348 = scmp.lt.s32.totalorder %s345, 3
        %s349 = scalar_select %p348, %s345, 3
        %s350 = smul.addr %s347, 4
        %s351 = sadd.s32 %s349, %s350
        %s352 = smul.addr %s351, 8
        %s353 = scalar_lea.vmem %s1, %s352
        %p354 = pneg %p97
        %p355 = pneg %p94
        %p356 = pneg %p118
        %p357 = pneg %p115
        %p358 = pneg %p139
        %p359 = pneg %p136
        %p360 = pneg %p160
        %p361 = pneg %p157
        %p362 = pneg %p181
        %p363 = pneg %p178
        %p364 = pneg %p202
        %p365 = pneg %p199
        %p366 = pneg %p230
        %p367 = pneg %p227
        %s368 = sand.u32 %s217, 1
        %s369 = scalar_lea.sflag [#allocation3], %s368
        %s370 = sand.u32 %s217, 1
        %s371 = smul.addr %s370, 32
        %s372 = scalar_lea.vmem [#allocation2], %s371
        %p373 = pneg %p258
        %p374 = pneg %p255
        %s375 = sand.u32 %s245, 1
        %s376 = scalar_lea.sflag [#allocation5], %s375
        %s377 = sand.u32 %s245, 1
        %s378 = smul.addr %s377, 64
        %s379 = scalar_lea.vmem [#allocation4], %s378
        %s380 = smul.u32 4, %s31
        %p381 = scmp.lt.s32.totalorder %s30, 1
        %s382 = scalar_select %p381, %s30, 1
        %p383 = scmp.lt.s32.totalorder %s380, 3
        %s384 = scalar_select %p383, %s380, 3
        %s385 = smul.addr %s382, 4
        %s386 = sadd.s32 %s384, %s385
        %s387 = smul.addr %s386, 8
        %s388 = scalar_lea.vmem %s0, %s387
        %s389 = smul.u32 4, %s31
        %s390 = smul.u32 %s31, 4
        %s391 = ssub.s32 %s390, 1
        %p392 = scmp.gt.s32.totalorder %s391, 0
        %s393 = scalar_select %p392, %s391, 0
        %p394 = scmp.lt.s32.totalorder %s30, 1
        %s395 = scalar_select %p394, %s30, 1
        %p396 = scmp.lt.s32.totalorder %s393, 3
        %s397 = scalar_select %p396, %s393, 3
        %s398 = smul.addr %s395, 4
        %s399 = sadd.s32 %s397, %s398
        %s400 = smul.addr %s399, 8
        %s401 = scalar_lea.vmem %s1, %s400
        %s402 = smul.u32 %s31, 4
        %s403 = ssub.s32 %s402, 1
        %p404 = scmp.gt.s32.totalorder %s403, 0
        %s405 = scalar_select %p404, %s403, 0
        %s406 = smul.u32 4, %s31
        %s407 = smul.u32 4, %s31
        %v408 = vld [vmem:[%s388] sm:$0xff]
        %v409 = vld [vmem:[%s388 + $0x8] sm:$0xff]
        %v410 = vld [vmem:[%s388 + $0x10] sm:$0xff]
        %v411 = vld [vmem:[%s388 + $0x18] sm:$0xff]
        %v412 = vld [vmem:[%s401] sm:$0xff]
        %p413 = scmp.ne.s32.totalorder %s31, 0
        %s414 = scalar_select %p413, 1, 0
        %s415 = scvt.s32.f32 %s414
        %416 = vrot.lane.b32.xlu0 %v412, 4
        %v417 = vpop.permute.xlu0 %416
        %v418 = vstv %s415
        %v419 = vmul.f32 %v417, %v418
        %420 = vrot.lane.b32.xlu0 %v408, 4
        %v421 = vpop.permute.xlu0 %420
        %422 = vrot.lane.b32.xlu0 %v409, 4
        %v423 = vpop.permute.xlu0 %422
        %424 = vrot.lane.b32.xlu0 %v410, 4
        %v425 = vpop.permute.xlu0 %424
        %426 = vrot.lane.b32.xlu0 %v411, 4
        %v427 = vpop.permute.xlu0 %426
        %v428 = vlaneseq
        %v429 = vand.u32 %v428, 127
        %vm430 = vcmp.lt.s32.totalorder %v429, 4
        %v431 = vsel %vm430, %v425, %v427
        %v432 = vsel %vm430, %v423, %v425
        %v433 = vsel %vm430, %v421, %v423
        %v434 = vsel %vm430, %v427, %v421
        %v435 = vsel %vm430, %v419, %v434
        %v436 = vld [vmem:[%s2] sm:$0xff]
        %v437 = vld [vmem:[%s3] sm:$0xff]
        %vm438 = vcmask 64512
        %v440 = vsel %vm438, %v437, 0
        %442 = vmatprep.subr.mxu0 %v409
        %443 = vmatpush1.msra.mxu0 %v408
        %444 = vmatprep.subr.mxu0 0.0
        %445 = vmatpush1.msra.mxu0 0.0
        %446 = vmatprep.subr.mxu0 0.0
        %447 = vmatpush1.msra.mxu0 0.0
        %448 = vmatprep.subr.mxu0 0.0
        %449 = vmatpush1.msra.mxu0 0.0
        %450 = vmatprep.subr.mxu0 0.0
        %451 = vmatpush1.msra.mxu0 0.0
        %452 = vmatprep.subr.mxu0 0.0
        %453 = vmatpush1.msra.mxu0 0.0
        %454 = vmatprep.subr.mxu0 0.0
        %455 = vmatpush1.msra.mxu0 0.0
        %456 = vmatprep.subr.mxu0 0.0
        %457 = vmatpush1.msra.mxu0 0.0
        %458 = vmatprep.subr.mxu0 0.0
        %459 = vmatpush1.msra.mxu0 0.0
        %460 = vmatprep.subr.mxu0 0.0
        %461 = vmatpush1.msra.mxu0 0.0
        %462 = vmatprep.subr.mxu0 0.0
        %463 = vmatpush1.msra.mxu0 0.0
        %464 = vmatprep.subr.mxu0 0.0
        %465 = vmatpush1.msra.mxu0 0.0
        %466 = vmatprep.subr.mxu0 0.0
        %467 = vmatpush1.msra.mxu0 0.0
        %468 = vmatprep.subr.mxu0 0.0
        %469 = vmatpush1.msra.mxu0 0.0
        %470 = vmatprep.subr.mxu0 0.0
        %471 = vmatpush1.msra.mxu0 0.0
        %472 = vmatprep.subr.mxu0 0.0
        %473 = vmatpush1.msra.mxu0 0.0
        %474 = vmatprep.subr.mxu0 0.0
        %475 = vmatpush1.msra.mxu0 0.0
        %476 = vmatprep.subr.mxu0 0.0
        %477 = vmatpush1.msra.mxu0 0.0
        %478 = vmatprep.subr.mxu0 0.0
        %479 = vmatpush1.msra.mxu0 0.0
        %480 = vmatprep.subr.mxu0 0.0
        %481 = vmatpush1.msra.mxu0 0.0
        %482 = vmatprep.subr.mxu0 0.0
        %483 = vmatpush1.msra.mxu0 0.0
        %484 = vmatprep.subr.mxu0 0.0
        %485 = vmatpush1.msra.mxu0 0.0
        %486 = vmatprep.subr.mxu0 0.0
        %487 = vmatpush1.msra.mxu0 0.0
        %488 = vmatprep.subr.mxu0 0.0
        %489 = vmatpush1.msra.mxu0 0.0
        %490 = vmatprep.subr.mxu0 0.0
        %491 = vmatpush1.msra.mxu0 0.0
        %492 = vmatprep.subr.mxu0 0.0
        %493 = vmatpush1.msra.mxu0 0.0
        %494 = vmatprep.subr.mxu0 0.0
        %495 = vmatpush1.msra.mxu0 0.0
        %496 = vmatprep.subr.mxu0 0.0
        %497 = vmatpush1.msra.mxu0 0.0
        %498 = vmatprep.subr.mxu0 0.0
        %499 = vmatpush1.msra.mxu0 0.0
        %500 = vmatprep.subr.mxu0 0.0
        %501 = vmatpush1.msra.mxu0 0.0
        %502 = vmatprep.subr.mxu0 0.0
        %503 = vmatpush1.msra.mxu0 0.0
        %504 = vmatprep.subr.mxu0 0.0
        %505 = vmatpush1.msra.mxu0 0.0
        %506 = vmatprep.mubr.f32.mxu0 0.0
        %507 = vmatmul.mubr.f32.gmra.mrb[0].mxu0 %v440
        %v508 = vpop.f32.mrb[0].mxu0
        %v509 = vadd.f32 0.0, %v508
        %v510 = vpop.f32.mrb[0].mxu0
        %v511 = vadd.f32 0.0, %v510
        %512 = vdwg.mxu0
        %513 = vmatprep.subr.mxu0 %v411
        %514 = vmatpush1.msra.mxu0 %v410
        %515 = vmatprep.subr.mxu0 0.0
        %516 = vmatpush1.msra.mxu0 0.0
        %517 = vmatprep.subr.mxu0 0.0
        %518 = vmatpush1.msra.mxu0 0.0
        %519 = vmatprep.subr.mxu0 0.0
        %520 = vmatpush1.msra.mxu0 0.0
        %521 = vmatprep.subr.mxu0 0.0
        %522 = vmatpush1.msra.mxu0 0.0
        %523 = vmatprep.subr.mxu0 0.0
        %524 = vmatpush1.msra.mxu0 0.0
        %525 = vmatprep.subr.mxu0 0.0
        %526 = vmatpush1.msra.mxu0 0.0
        %527 = vmatprep.subr.mxu0 0.0
        %528 = vmatpush1.msra.mxu0 0.0
        %529 = vmatprep.subr.mxu0 0.0
        %530 = vmatpush1.msra.mxu0 0.0
        %531 = vmatprep.subr.mxu0 0.0
        %532 = vmatpush1.msra.mxu0 0.0
        %533 = vmatprep.subr.mxu0 0.0
        %534 = vmatpush1.msra.mxu0 0.0
        %535 = vmatprep.subr.mxu0 0.0
        %536 = vmatpush1.msra.mxu0 0.0
        %537 = vmatprep.subr.mxu0 0.0
        %538 = vmatpush1.msra.mxu0 0.0
        %539 = vmatprep.subr.mxu0 0.0
        %540 = vmatpush1.msra.mxu0 0.0
        %541 = vmatprep.subr.mxu0 0.0
        %542 = vmatpush1.msra.mxu0 0.0
        %543 = vmatprep.subr.mxu0 0.0
        %544 = vmatpush1.msra.mxu0 0.0
        %545 = vmatprep.subr.mxu0 0.0
        %546 = vmatpush1.msra.mxu0 0.0
        %547 = vmatprep.subr.mxu0 0.0
        %548 = vmatpush1.msra.mxu0 0.0
        %549 = vmatprep.subr.mxu0 0.0
        %550 = vmatpush1.msra.mxu0 0.0
        %551 = vmatprep.subr.mxu0 0.0
        %552 = vmatpush1.msra.mxu0 0.0
        %553 = vmatprep.subr.mxu0 0.0
        %554 = vmatpush1.msra.mxu0 0.0
        %555 = vmatprep.subr.mxu0 0.0
        %556 = vmatpush1.msra.mxu0 0.0
        %557 = vmatprep.subr.mxu0 0.0
        %558 = vmatpush1.msra.mxu0 0.0
        %559 = vmatprep.subr.mxu0 0.0
        %560 = vmatpush1.msra.mxu0 0.0
        %561 = vmatprep.subr.mxu0 0.0
        %562 = vmatpush1.msra.mxu0 0.0
        %563 = vmatprep.subr.mxu0 0.0
        %564 = vmatpush1.msra.mxu0 0.0
        %565 = vmatprep.subr.mxu0 0.0
        %566 = vmatpush1.msra.mxu0 0.0
        %567 = vmatprep.subr.mxu0 0.0
        %568 = vmatpush1.msra.mxu0 0.0
        %569 = vmatprep.subr.mxu0 0.0
        %570 = vmatpush1.msra.mxu0 0.0
        %571 = vmatprep.subr.mxu0 0.0
        %572 = vmatpush1.msra.mxu0 0.0
        %573 = vmatprep.subr.mxu0 0.0
        %574 = vmatpush1.msra.mxu0 0.0
        %575 = vmatprep.subr.mxu0 0.0
        %576 = vmatpush1.msra.mxu0 0.0
        %577 = vmatprep.mubr.f32.mxu0 0.0
        %578 = vmatmul.mubr.f32.gmra.mrb[0].mxu0 %v440
        %v579 = vpop.f32.mrb[0].mxu0
        %v580 = vadd.f32 0.0, %v579
        %v581 = vpop.f32.mrb[0].mxu0
        %v582 = vadd.f32 0.0, %v581
        %583 = vdwg.mxu0
        %v585 = vsel %vm438, %v436, 0
        %587 = vmatprep.subr.mxu0 %v433
        %588 = vmatpush1.msra.mxu0 %v435
        %589 = vmatprep.subr.mxu0 0.0
        %590 = vmatpush1.msra.mxu0 0.0
        %591 = vmatprep.subr.mxu0 0.0
        %592 = vmatpush1.msra.mxu0 0.0
        %593 = vmatprep.subr.mxu0 0.0
        %594 = vmatpush1.msra.mxu0 0.0
        %595 = vmatprep.subr.mxu0 0.0
        %596 = vmatpush1.msra.mxu0 0.0
        %597 = vmatprep.subr.mxu0 0.0
        %598 = vmatpush1.msra.mxu0 0.0
        %599 = vmatprep.subr.mxu0 0.0
        %600 = vmatpush1.msra.mxu0 0.0
        %601 = vmatprep.subr.mxu0 0.0
        %602 = vmatpush1.msra.mxu0 0.0
        %603 = vmatprep.subr.mxu0 0.0
        %604 = vmatpush1.msra.mxu0 0.0
        %605 = vmatprep.subr.mxu0 0.0
        %606 = vmatpush1.msra.mxu0 0.0
        %607 = vmatprep.subr.mxu0 0.0
        %608 = vmatpush1.msra.mxu0 0.0
        %609 = vmatprep.subr.mxu0 0.0
        %610 = vmatpush1.msra.mxu0 0.0
        %611 = vmatprep.subr.mxu0 0.0
        %612 = vmatpush1.msra.mxu0 0.0
        %613 = vmatprep.subr.mxu0 0.0
        %614 = vmatpush1.msra.mxu0 0.0
        %615 = vmatprep.subr.mxu0 0.0
        %616 = vmatpush1.msra.mxu0 0.0
        %617 = vmatprep.subr.mxu0 0.0
        %618 = vmatpush1.msra.mxu0 0.0
        %619 = vmatprep.subr.mxu0 0.0
        %620 = vmatpush1.msra.mxu0 0.0
        %621 = vmatprep.subr.mxu0 0.0
        %622 = vmatpush1.msra.mxu0 0.0
        %623 = vmatprep.subr.mxu0 0.0
        %624 = vmatpush1.msra.mxu0 0.0
        %625 = vmatprep.subr.mxu0 0.0
        %626 = vmatpush1.msra.mxu0 0.0
        %627 = vmatprep.subr.mxu0 0.0
        %628 = vmatpush1.msra.mxu0 0.0
        %629 = vmatprep.subr.mxu0 0.0
        %630 = vmatpush1.msra.mxu0 0.0
        %631 = vmatprep.subr.mxu0 0.0
        %632 = vmatpush1.msra.mxu0 0.0
        %633 = vmatprep.subr.mxu0 0.0
        %634 = vmatpush1.msra.mxu0 0.0
        %635 = vmatprep.subr.mxu0 0.0
        %636 = vmatpush1.msra.mxu0 0.0
        %637 = vmatprep.subr.mxu0 0.0
        %638 = vmatpush1.msra.mxu0 0.0
        %639 = vmatprep.subr.mxu0 0.0
        %640 = vmatpush1.msra.mxu0 0.0
        %641 = vmatprep.subr.mxu0 0.0
        %642 = vmatpush1.msra.mxu0 0.0
        %643 = vmatprep.subr.mxu0 0.0
        %644 = vmatpush1.msra.mxu0 0.0
        %645 = vmatprep.subr.mxu0 0.0
        %646 = vmatpush1.msra.mxu0 0.0
        %647 = vmatprep.subr.mxu0 0.0
        %648 = vmatpush1.msra.mxu0 0.0
        %649 = vmatprep.subr.mxu0 0.0
        %650 = vmatpush1.msra.mxu0 0.0
        %651 = vmatprep.mubr.f32.mxu0 0.0
        %652 = vmatmul.mubr.f32.gmra.mrb[0].mxu0 %v585
        %v653 = vpop.f32.mrb[0].mxu0
        %v654 = vadd.f32 %v509, %v653
        %v655 = vpop.f32.mrb[0].mxu0
        %v656 = vadd.f32 %v511, %v655
        %657 = vdwg.mxu0
        %658 = vmatprep.subr.mxu0 %v431
        %659 = vmatpush1.msra.mxu0 %v432
        %660 = vmatprep.subr.mxu0 0.0
        %661 = vmatpush1.msra.mxu0 0.0
        %662 = vmatprep.subr.mxu0 0.0
        %663 = vmatpush1.msra.mxu0 0.0
        %664 = vmatprep.subr.mxu0 0.0
        %665 = vmatpush1.msra.mxu0 0.0
        %666 = vmatprep.subr.mxu0 0.0
        %667 = vmatpush1.msra.mxu0 0.0
        %668 = vmatprep.subr.mxu0 0.0
        %669 = vmatpush1.msra.mxu0 0.0
        %670 = vmatprep.subr.mxu0 0.0
        %671 = vmatpush1.msra.mxu0 0.0
        %672 = vmatprep.subr.mxu0 0.0
        %673 = vmatpush1.msra.mxu0 0.0
        %674 = vmatprep.subr.mxu0 0.0
        %675 = vmatpush1.msra.mxu0 0.0
        %676 = vmatprep.subr.mxu0 0.0
        %677 = vmatpush1.msra.mxu0 0.0
        %678 = vmatprep.subr.mxu0 0.0
        %679 = vmatpush1.msra.mxu0 0.0
        %680 = vmatprep.subr.mxu0 0.0
        %681 = vmatpush1.msra.mxu0 0.0
        %682 = vmatprep.subr.mxu0 0.0
        %683 = vmatpush1.msra.mxu0 0.0
        %684 = vmatprep.subr.mxu0 0.0
        %685 = vmatpush1.msra.mxu0 0.0
        %686 = vmatprep.subr.mxu0 0.0
        %687 = vmatpush1.msra.mxu0 0.0
        %688 = vmatprep.subr.mxu0 0.0
        %689 = vmatpush1.msra.mxu0 0.0
        %690 = vmatprep.subr.mxu0 0.0
        %691 = vmatpush1.msra.mxu0 0.0
        %692 = vmatprep.subr.mxu0 0.0
        %693 = vmatpush1.msra.mxu0 0.0
        %694 = vmatprep.subr.mxu0 0.0
        %695 = vmatpush1.msra.mxu0 0.0
        %696 = vmatprep.subr.mxu0 0.0
        %697 = vmatpush1.msra.mxu0 0.0
        %698 = vmatprep.subr.mxu0 0.0
        %699 = vmatpush1.msra.mxu0 0.0
        %700 = vmatprep.subr.mxu0 0.0
        %701 = vmatpush1.msra.mxu0 0.0
        %702 = vmatprep.subr.mxu0 0.0
        %703 = vmatpush1.msra.mxu0 0.0
        %704 = vmatprep.subr.mxu0 0.0
        %705 = vmatpush1.msra.mxu0 0.0
        %706 = vmatprep.subr.mxu0 0.0
        %707 = vmatpush1.msra.mxu0 0.0
        %708 = vmatprep.subr.mxu0 0.0
        %709 = vmatpush1.msra.mxu0 0.0
        %710 = vmatprep.subr.mxu0 0.0
        %711 = vmatpush1.msra.mxu0 0.0
        %712 = vmatprep.subr.mxu0 0.0
        %713 = vmatpush1.msra.mxu0 0.0
        %714 = vmatprep.subr.mxu0 0.0
        %715 = vmatpush1.msra.mxu0 0.0
        %716 = vmatprep.subr.mxu0 0.0
        %717 = vmatpush1.msra.mxu0 0.0
        %718 = vmatprep.subr.mxu0 0.0
        %719 = vmatpush1.msra.mxu0 0.0
        %720 = vmatprep.subr.mxu0 0.0
        %721 = vmatpush1.msra.mxu0 0.0
        %722 = vmatprep.mubr.f32.mxu0 0.0
        %723 = vmatmul.mubr.f32.gmra.mrb[0].mxu0 %v585
        %v724 = vpop.f32.mrb[0].mxu0
        %v725 = vadd.f32 %v580, %v724
        %v726 = vpop.f32.mrb[0].mxu0
        %v727 = vadd.f32 %v582, %v726
        %728 = vdwg.mxu0
        %v729 = vld [vmem:[%s4] sm:$0xff]
        %731 = vset.pattern.permute.xlu0 0
        %732 = vperm.xlu0 %731, %v729
        %v733 = vpop.permute.xlu0 %732
        %v735 = vadd.f32 %v654, %v733
        %v736 = vadd.f32 %v656, %v733
        %v737 = vadd.f32 %v725, %v733
        %v738 = vadd.f32 %v727, %v733
        %v739 = vtanh.pop %v735
        %v740 = vtanh.pop %v736
        %v741 = vtanh.pop %v737
        %v742 = vtanh.pop %v738
        %v743 = vxor.u32 %v735, 2147483648
        %v744 = vxor.u32 %v736, 2147483648
        %v745 = vxor.u32 %v737, 2147483648
        %v746 = vxor.u32 %v738, 2147483648
        %v747 = vmul.f32 %v743, 1.442695
        %v748 = vpow.pop %v747
        %v749 = vmul.f32 %v744, 1.442695
        %v750 = vpow.pop %v749
        %v751 = vmul.f32 %v745, 1.442695
        %v752 = vpow.pop %v751
        %v753 = vmul.f32 %v746, 1.442695
        %v754 = vpow.pop %v753
        %v755 = vadd.f32 %v748, 1.0
        %v756 = vadd.f32 %v750, 1.0
        %v757 = vadd.f32 %v752, 1.0
        %v758 = vadd.f32 %v754, 1.0
        %v759 = vrcp.pop %v755
        %v760 = vmul.f32 1.0, %v759
        %v761 = vrcp.pop %v756
        %v762 = vmul.f32 1.0, %v761
        %v763 = vrcp.pop %v757
        %v764 = vmul.f32 1.0, %v763
        %v765 = vrcp.pop %v758
        %v766 = vmul.f32 1.0, %v765
        %v767 = vmul.f32 %v739, %v760
        %v768 = vmul.f32 %v740, %v762
        %v769 = vmul.f32 %v741, %v764
        %v770 = vmul.f32 %v742, %v766
        %v771 = vld [vmem:[%s5] sm:$0xff]
        %v772 = vld [vmem:[%s5 + $0x8] sm:$0xff]
        %v773 = vld [vmem:[%s5 + $0x10] sm:$0xff]
        %v774 = vld [vmem:[%s6] sm:$0xff]
        %v775 = vld [vmem:[%s6 + $0x8] sm:$0xff]
        %v776 = vld [vmem:[%s6 + $0x10] sm:$0xff]
        %778 = vset.pattern.permute.xlu0 0
        %779 = vperm.xlu0 %778, %v774
        %v780 = vpop.permute.xlu0 %779
        %783 = vset.pattern.permute.xlu0 0
        %784 = vperm.xlu0 %783, %v775
        %v785 = vpop.permute.xlu0 %784
        %788 = vset.pattern.permute.xlu0 0
        %789 = vperm.xlu0 %788, %v776
        %v790 = vpop.permute.xlu0 %789
        %v793 = vsel %vm438, %v771, 0
        %v796 = vsel %vm438, %v772, 0
        %v799 = vsel %vm438, %v773, 0
        %801 = vmatprep.subr.mxu0 %v768
        %802 = vmatpush1.msra.mxu0 %v767
        %803 = vmatprep.subr.mxu0 0.0
        %804 = vmatpush1.msra.mxu0 0.0
        %805 = vmatprep.subr.mxu0 0.0
        %806 = vmatpush1.msra.mxu0 0.0
        %807 = vmatprep.subr.mxu0 0.0
        %808 = vmatpush1.msra.mxu0 0.0
        %809 = vmatprep.subr.mxu0 0.0
        %810 = vmatpush1.msra.mxu0 0.0
        %811 = vmatprep.subr.mxu0 0.0
        %812 = vmatpush1.msra.mxu0 0.0
        %813 = vmatprep.subr.mxu0 0.0
        %814 = vmatpush1.msra.mxu0 0.0
        %815 = vmatprep.subr.mxu0 0.0
        %816 = vmatpush1.msra.mxu0 0.0
        %817 = vmatprep.subr.mxu0 0.0
        %818 = vmatpush1.msra.mxu0 0.0
        %819 = vmatprep.subr.mxu0 0.0
        %820 = vmatpush1.msra.mxu0 0.0
        %821 = vmatprep.subr.mxu0 0.0
        %822 = vmatpush1.msra.mxu0 0.0
        %823 = vmatprep.subr.mxu0 0.0
        %824 = vmatpush1.msra.mxu0 0.0
        %825 = vmatprep.subr.mxu0 0.0
        %826 = vmatpush1.msra.mxu0 0.0
        %827 = vmatprep.subr.mxu0 0.0
        %828 = vmatpush1.msra.mxu0 0.0
        %829 = vmatprep.subr.mxu0 0.0
        %830 = vmatpush1.msra.mxu0 0.0
        %831 = vmatprep.subr.mxu0 0.0
        %832 = vmatpush1.msra.mxu0 0.0
        %833 = vmatprep.subr.mxu0 0.0
        %834 = vmatpush1.msra.mxu0 0.0
        %835 = vmatprep.subr.mxu0 0.0
        %836 = vmatpush1.msra.mxu0 0.0
        %837 = vmatprep.subr.mxu0 0.0
        %838 = vmatpush1.msra.mxu0 0.0
        %839 = vmatprep.subr.mxu0 0.0
        %840 = vmatpush1.msra.mxu0 0.0
        %841 = vmatprep.subr.mxu0 0.0
        %842 = vmatpush1.msra.mxu0 0.0
        %843 = vmatprep.subr.mxu0 0.0
        %844 = vmatpush1.msra.mxu0 0.0
        %845 = vmatprep.subr.mxu0 0.0
        %846 = vmatpush1.msra.mxu0 0.0
        %847 = vmatprep.subr.mxu0 0.0
        %848 = vmatpush1.msra.mxu0 0.0
        %849 = vmatprep.subr.mxu0 0.0
        %850 = vmatpush1.msra.mxu0 0.0
        %851 = vmatprep.subr.mxu0 0.0
        %852 = vmatpush1.msra.mxu0 0.0
        %853 = vmatprep.subr.mxu0 0.0
        %854 = vmatpush1.msra.mxu0 0.0
        %855 = vmatprep.subr.mxu0 0.0
        %856 = vmatpush1.msra.mxu0 0.0
        %857 = vmatprep.subr.mxu0 0.0
        %858 = vmatpush1.msra.mxu0 0.0
        %859 = vmatprep.subr.mxu0 0.0
        %860 = vmatpush1.msra.mxu0 0.0
        %861 = vmatprep.subr.mxu0 0.0
        %862 = vmatpush1.msra.mxu0 0.0
        %863 = vmatprep.subr.mxu0 0.0
        %864 = vmatpush1.msra.mxu0 0.0
        %865 = vmatprep.mubr.f32.mxu0 0.0
        %866 = vmatmul.mubr.f32.gmra.mrb[0].mxu0 %v793
        %v867 = vpop.f32.mrb[0].mxu0
        %v868 = vadd.f32 %v780, %v867
        %v869 = vpop.f32.mrb[0].mxu0
        %v870 = vadd.f32 %v780, %v869
        %871 = vmatprep.mubr.f32.mxu0 0.0
        %872 = vmatmul.mubr.f32.gmra.mrb[0].mxu0 %v796
        %v873 = vpop.f32.mrb[0].mxu0
        %v874 = vadd.f32 %v785, %v873
        %v875 = vpop.f32.mrb[0].mxu0
        %v876 = vadd.f32 %v785, %v875
        %877 = vmatprep.mubr.f32.mxu0 0.0
        %878 = vmatmul.mubr.f32.gmra.mrb[0].mxu0 %v799
        %v879 = vpop.f32.mrb[0].mxu0
        %v880 = vadd.f32 %v790, %v879
        %v881 = vpop.f32.mrb[0].mxu0
        %v882 = vadd.f32 %v790, %v881
        %883 = vdwg.mxu0
        %884 = vmatprep.subr.mxu0 %v770
        %885 = vmatpush1.msra.mxu0 %v769
        %886 = vmatprep.subr.mxu0 0.0
        %887 = vmatpush1.msra.mxu0 0.0
        %888 = vmatprep.subr.mxu0 0.0
        %889 = vmatpush1.msra.mxu0 0.0
        %890 = vmatprep.subr.mxu0 0.0
        %891 = vmatpush1.msra.mxu0 0.0
        %892 = vmatprep.subr.mxu0 0.0
        %893 = vmatpush1.msra.mxu0 0.0
        %894 = vmatprep.subr.mxu0 0.0
        %895 = vmatpush1.msra.mxu0 0.0
        %896 = vmatprep.subr.mxu0 0.0
        %897 = vmatpush1.msra.mxu0 0.0
        %898 = vmatprep.subr.mxu0 0.0
        %899 = vmatpush1.msra.mxu0 0.0
        %900 = vmatprep.subr.mxu0 0.0
        %901 = vmatpush1.msra.mxu0 0.0
        %902 = vmatprep.subr.mxu0 0.0
        %903 = vmatpush1.msra.mxu0 0.0
        %904 = vmatprep.subr.mxu0 0.0
        %905 = vmatpush1.msra.mxu0 0.0
        %906 = vmatprep.subr.mxu0 0.0
        %907 = vmatpush1.msra.mxu0 0.0
        %908 = vmatprep.subr.mxu0 0.0
        %909 = vmatpush1.msra.mxu0 0.0
        %910 = vmatprep.subr.mxu0 0.0
        %911 = vmatpush1.msra.mxu0 0.0
        %912 = vmatprep.subr.mxu0 0.0
        %913 = vmatpush1.msra.mxu0 0.0
        %914 = vmatprep.subr.mxu0 0.0
        %915 = vmatpush1.msra.mxu0 0.0
        %916 = vmatprep.subr.mxu0 0.0
        %917 = vmatpush1.msra.mxu0 0.0
        %918 = vmatprep.subr.mxu0 0.0
        %919 = vmatpush1.msra.mxu0 0.0
        %920 = vmatprep.subr.mxu0 0.0
        %921 = vmatpush1.msra.mxu0 0.0
        %922 = vmatprep.subr.mxu0 0.0
        %923 = vmatpush1.msra.mxu0 0.0
        %924 = vmatprep.subr.mxu0 0.0
        %925 = vmatpush1.msra.mxu0 0.0
        %926 = vmatprep.subr.mxu0 0.0
        %927 = vmatpush1.msra.mxu0 0.0
        %928 = vmatprep.subr.mxu0 0.0
        %929 = vmatpush1.msra.mxu0 0.0
        %930 = vmatprep.subr.mxu0 0.0
        %931 = vmatpush1.msra.mxu0 0.0
        %932 = vmatprep.subr.mxu0 0.0
        %933 = vmatpush1.msra.mxu0 0.0
        %934 = vmatprep.subr.mxu0 0.0
        %935 = vmatpush1.msra.mxu0 0.0
        %936 = vmatprep.subr.mxu0 0.0
        %937 = vmatpush1.msra.mxu0 0.0
        %938 = vmatprep.subr.mxu0 0.0
        %939 = vmatpush1.msra.mxu0 0.0
        %940 = vmatprep.subr.mxu0 0.0
        %941 = vmatpush1.msra.mxu0 0.0
        %942 = vmatprep.subr.mxu0 0.0
        %943 = vmatpush1.msra.mxu0 0.0
        %944 = vmatprep.subr.mxu0 0.0
        %945 = vmatpush1.msra.mxu0 0.0
        %946 = vmatprep.subr.mxu0 0.0
        %947 = vmatpush1.msra.mxu0 0.0
        %948 = vmatprep.mubr.f32.mxu0 0.0
        %949 = vmatmul.mubr.f32.gmra.mrb[0].mxu0 %v793
        %v950 = vpop.f32.mrb[0].mxu0
        %v951 = vadd.f32 %v780, %v950
        %v952 = vpop.f32.mrb[0].mxu0
        %v953 = vadd.f32 %v780, %v952
        %954 = vmatprep.mubr.f32.mxu0 0.0
        %955 = vmatmul.mubr.f32.gmra.mrb[0].mxu0 %v796
        %v956 = vpop.f32.mrb[0].mxu0
        %v957 = vadd.f32 %v785, %v956
        %v958 = vpop.f32.mrb[0].mxu0
        %v959 = vadd.f32 %v785, %v958
        %960 = vmatprep.mubr.f32.mxu0 0.0
        %961 = vmatmul.mubr.f32.gmra.mrb[0].mxu0 %v799
        %v962 = vpop.f32.mrb[0].mxu0
        %v963 = vadd.f32 %v790, %v962
        %v964 = vpop.f32.mrb[0].mxu0
        %v965 = vadd.f32 %v790, %v964
        %966 = vdwg.mxu0
        %v967 = vadd.f32 %v408, %v868
        %v968 = vadd.f32 %v409, %v870
        %v969 = vadd.f32 %v410, %v951
        %v970 = vadd.f32 %v411, %v953
        %971 = vst [vmem:[%s372] sm:$0xff] %v967
        %972 = vst [vmem:[%s372 + $0x8] sm:$0xff] %v968
        %973 = vst [vmem:[%s372 + $0x10] sm:$0xff] %v969
        %974 = vst [vmem:[%s372 + $0x18] sm:$0xff] %v970
        %975 = vst [vmem:[%s379] sm:$0xff] %v874
        %976 = vst [vmem:[%s379 + $0x8] sm:$0xff] %v876
        %977 = vst [vmem:[%s379 + $0x10] sm:$0xff] %v957
        %978 = vst [vmem:[%s379 + $0x18] sm:$0xff] %v959
        %979 = vst [vmem:[%s379 + $0x20] sm:$0xff] %v880
        %980 = vst [vmem:[%s379 + $0x28] sm:$0xff] %v882
        %981 = vst [vmem:[%s379 + $0x30] sm:$0xff] %v963
        %982 = vst [vmem:[%s379 + $0x38] sm:$0xff] %v965
        %s983 = sand.u32 %s217, 1
        %s984 = scalar_lea.sflag [#allocation3], %s983
        %s985 = sand.u32 %s217, 1
        %s986 = smul.addr %s985, 32
        %s987 = scalar_lea.vmem [#allocation2], %s986
        %s988 = sand.u32 %s245, 1
        %s989 = scalar_lea.sflag [#allocation5], %s988
        %s990 = sand.u32 %s245, 1
        %s991 = smul.addr %s990, 64
        %s992 = scalar_lea.vmem [#allocation4], %s991
        // Predicated region
        $region49: #{wavenet_layer_pallas.1} parent=47 // pred_check
          %p993 = pneg %p227
        $region50: #{wavenet_layer_pallas.1} parent=47 // pred_check_branch
          %995 = sbr.rel (%p993) target = $region52
        $region51: #{wavenet_layer_pallas.1} parent=47 // pred_region
          %s996 = smul.u32 4, %s31
          %s998 = ssub.s32 512, 512
          %999 = vsyncadd %s984, %s998
          %s1000 = smul.addr %s30, 4
          %s1001 = sadd.s32 %s996, %s1000
          %s1002 = smul.addr %s1001, 128
          %s1003 = scalar_lea.hbm %s7, %s1002
          %s1005 = sshll.u32 %s987, 4
          %s1006 = int_to_ptr.vmem [resolvable:$true] %s1005
          %1008 = dma.vmem_to_hbm [thread:$0]  %s1006, 512, %s1003, %s984
        $region52: #{wavenet_layer_pallas.1} parent=47 // pred_fallthru
          _
        // Predicated region
        $region53: #{wavenet_layer_pallas.1} parent=47 // pred_check
          %p1009 = pneg %p255
        $region54: #{wavenet_layer_pallas.1} parent=47 // pred_check_branch
          %1011 = sbr.rel (%p1009) target = $region56
        $region55: #{wavenet_layer_pallas.1} parent=47 // pred_region
          %s1012 = smul.u32 4, %s31
          %s1014 = ssub.s32 1024, 1024
          %1015 = vsyncadd %s989, %s1014
          %s1016 = smul.addr %s30, 8
          %s1017 = sadd.s32 %s1012, %s1016
          %s1018 = smul.addr %s1017, 128
          %s1019 = scalar_lea.hbm %s8, %s1018
          %s1020 = sshll.u32 %s992, 4
          %s1021 = int_to_ptr.vmem [resolvable:$true] %s1020
          %1026 = dma.vmem_to_hbm [thread:$0]  %s1021, 1024, %s1019, %s989, 512, 512, 32
        $region56: #{wavenet_layer_pallas.1} parent=47 // pred_fallthru
          _
      $region48: #{wavenet_layer_pallas.1} parent=5 // pred_fallthru
        _
      %p1027 = scmp.le.s32.totalorder 2, %s21
      // Predicated region
      $region57: #{wavenet_layer_pallas.1} parent=5 // pred_check
        %p1028 = pneg %p1027
      $region58: #{wavenet_layer_pallas.1} parent=5 // pred_check_branch
        %1030 = sbr.rel (%p1028) target = $region60
      $region59: #{wavenet_layer_pallas.1} parent=5 // pred_region
        %s1031 = ssub.s32 %s21, 2
        // Predicated region
        $region61: #{wavenet_layer_pallas.1} parent=59 // pred_check
          %p1032 = pneg %p233
        $region62: #{wavenet_layer_pallas.1} parent=59 // pred_check_branch
          %1034 = sbr.rel (%p1032) target = $region64
        $region63: #{wavenet_layer_pallas.1} parent=59 // pred_region
          %s1035 = sand.u32 %s218, 1
          %s1036 = scalar_lea.sflag [#allocation3], %s1035
          %s1037 = sand.u32 %s218, 1
          %s1038 = smul.addr %s1037, 32
          %s1039 = scalar_lea.vmem [#allocation2], %s1038
          %1040 = dma.done %s1036, 512
        $region64: #{wavenet_layer_pallas.1} parent=59 // pred_fallthru
          _
        // Predicated region
        $region65: #{wavenet_layer_pallas.1} parent=59 // pred_check
          %p1041 = pneg %p261
        $region66: #{wavenet_layer_pallas.1} parent=59 // pred_check_branch
          %1043 = sbr.rel (%p1041) target = $region68
        $region67: #{wavenet_layer_pallas.1} parent=59 // pred_region
          %s1044 = sand.u32 %s246, 1
          %s1045 = scalar_lea.sflag [#allocation5], %s1044
          %s1046 = sand.u32 %s246, 1
          %s1047 = smul.addr %s1046, 64
          %s1048 = scalar_lea.vmem [#allocation4], %s1047
          %1049 = dma.done %s1045, 1024
        $region68: #{wavenet_layer_pallas.1} parent=59 // pred_fallthru
          _
      $region60: #{wavenet_layer_pallas.1} parent=5 // pred_fallthru
        _
    $region6: #{wavenet_layer_pallas.1} parent=1 // loop_footer
      %s25 = sadd.s32 1, %s21
    $region7: #{wavenet_layer_pallas.1} parent=1 // loop_footer_branch
      %20 = sbr.rel target = $region3
    $region8: #{wavenet_layer_pallas.1} parent=1 // loop_exit
      _
    %1050 = vsyncpa [#allocation3], 1
    %s1051 = scalar_lea.sflag [#allocation3], 1
    %1052 = vsyncpa %s1051, 1
    %1053 = vsyncpa [#allocation5], 1
    %s1054 = scalar_lea.sflag [#allocation5], 1
    %1055 = vsyncpa %s1054, 1

</llo_original>
